<compile_context>
chip_gen: v5e
topology: v5e:2x2
jax: 0.10.0
libtpu: 0.0.40
codegen_flags: <defaults>
</compile_context>

<pallas_src>
import functools
import math

import jax
import jax.numpy as jnp
import numpy as np
from jax import lax
from jax.experimental import pallas as pl
from jax.experimental.pallas import tpu as pltpu


def _round_up(x, m):
    return ((x + m - 1) // m) * m


def _tpu_generation():
    try:
        kind = jax.devices()[0].device_kind.lower()
    except Exception:
        return 0
    if "v7" in kind or "7x" in kind:
        return 7
    for gen in (6, 5, 4):
        if "v%d" % gen in kind:
            return gen
    return 0


def _vmem_capacity_bytes():
    try:
        return int(pltpu.get_tpu_info().vmem_capacity_bytes)
    except Exception:
        # v7x has 64 MiB per TensorCore; older generations have 128 MiB.
        return (128 if _tpu_generation() in (4, 5, 6) else 64) * 1024 * 1024


def _auto_dtypes(matmul_dtype, g_dtype):
    # bf16 MXU operands and a bf16-stored G pay off on v6e/v7x (bf16 VPU+MXU);
    # keep everything f32 on v5e (no bf16 VALU) and on unknown chips.
    fast_bf16 = _tpu_generation() >= 6
    if matmul_dtype is None:
        matmul_dtype = jnp.bfloat16 if fast_bf16 else jnp.float32
    if g_dtype is None:
        g_dtype = jnp.bfloat16 if fast_bf16 else jnp.float32
    return matmul_dtype, g_dtype


def _col_to_row(col, *, via_transpose):
    """(N, 1) -> (1, N) relayout of a working vector."""
    if via_transpose:
        return col.T                      # O(N) XLU relayout (preferred)
    # Fallback built only from ops already proven on the previous revision
    # (column broadcast + iota mask + axis-0 reduce).  O(N^2), only used if
    # the skinny transpose fails to lower on a given toolchain.
    n = col.shape[0]
    rr = lax.broadcasted_iota(jnp.int32, (n, n), 0)
    cc = lax.broadcasted_iota(jnp.int32, (n, n), 1)
    return jnp.sum(jnp.where(rr == cc, col, 0.0), axis=0, keepdims=True)


def _learnability_kernel(a_ref, x_ref, xt_ref, s_ref, y_ref, out_ref, *,
                         order, binary, matmul_dtype, g_dtype, via_transpose):
    X = x_ref[...]            # (N, D) f32   minibatch samples
    XT = xt_ref[...]          # (D, N) f32   transposed in the wrapper (layout only)
    s_row = s_ref[...]        # (1, D) f32
    y_row = y_ref[...]        # (1, N) f32
    N = X.shape[0]

    # ---- hoisted: the ONLY MXU op ------------------------------------------
    # G[i, j] = sum_d X[i,d] * s[d] * X[j,d] via a native (N,D)@(D,N) matmul
    # (no in-kernel operand relayout).  f32 accumulation; optionally stored in
    # bf16 for the loop (halves vld traffic + footprint on v6e/v7x).
    Xs = X * s_row
    G = jnp.dot(Xs.astype(matmul_dtype), XT.astype(matmul_dtype),
                preferred_element_type=jnp.float32)
    G = G.astype(g_dtype)

    # Working vectors live in a single lane-dense (1, N) row layout; the
    # r-chain (even i) and l-chain (odd i) stay separate SSA values.
    l_row = y_row
    r_row = y_row
    z = jnp.zeros((1, 1), jnp.float32)

    # `order` is a small static constant -> fully unrolled Python loop.
    # Per iteration: one lazily-masked (N,N) multiply (VPU) + lane-reduce
    # (XLU), one O(N) relayout, one lane-dense reduce for p.  Zero MXU ops,
    # zero materialized Gu/Gl copies.
    for i in range(order):
        rows = lax.broadcasted_iota(jnp.int32, (N, N), 0)
        cols = lax.broadcasted_iota(jnp.int32, (N, N), 1)
        if i % 2 == 0:
            # triudr + (Z @ s): r_new[i] = sum_{j>i} G[i,j] * r[j]
            mask = cols > rows
            vec = r_row
        else:
            # triudl + (Z @ s): l_new[i] = sum_{j<i} G[i,j] * l[j]
            mask = cols < rows
            vec = l_row
        masked = jnp.where(mask, G, jnp.zeros_like(G))            # g_dtype
        new_col = jnp.sum(masked * vec, axis=1, keepdims=True)    # f32 accum, (N,1)
        new_row = _col_to_row(new_col, via_transpose=via_transpose)
        if i % 2 == 0:
            r_row = new_row
        else:
            l_row = new_row
        # a[i] * (l.T @ r) as a lane-dense multiply + reduce; adding a[i] * p
        # when a[i] == 0 matches the torch skip.
        p = jnp.sum(l_row * r_row, axis=1, keepdims=True)         # (1, 1)
        z = z + a_ref[i] * p

    if not binary:
        out = 1.0 - z
    else:
        # ramp (clamp to [0, 1]) then safesqrt; forward semantics only.
        out = 0.5 * (1.0 - jnp.sqrt(jnp.clip(z, 0.0, 1.0)))
    out_ref[...] = out.astype(out_ref.dtype)


def learnability_mb_batched(a, X, s, y, *, binary=False,
                            matmul_dtype=None, g_dtype=None):
    """Forward of LearnabilityMB over a batch of minibatches.

    X: (B, N, D) or (N, D); y: (B, N[,1]) or (N[,1]); s: (D[,1]); a: (order,).
    Returns (B, 1, 1) float32.
    """
    a = jnp.asarray(a, jnp.float32).reshape(-1)
    X = jnp.asarray(X, jnp.float32)
    if X.ndim == 2:
        X = X[None]
    B, N, D = X.shape
    s = jnp.asarray(s, jnp.float32).reshape(-1)
    y = jnp.asarray(y, jnp.float32).reshape(B, N)
    order = int(a.shape[0])
    matmul_dtype, g_dtype = _auto_dtypes(matmul_dtype, g_dtype)

    # Pad N with zero rows (exact: zero rows of X / y contribute nothing to
    # the masked contractions) so G and the reduces see friendly extents.
    if N % 128 == 0:
        Np = N
    elif N < 128:
        Np = _round_up(N, 8)
    else:
        Np = _round_up(N, 128)
    if Np != N:
        X = jnp.pad(X, ((0, 0), (0, Np - N), (0, 0)))
        y = jnp.pad(y, ((0, 0), (0, Np - N)))

    XT = jnp.swapaxes(X, -1, -2)          # (B, D, Np): MXU-native RHS (layout only)
    s_row = s.reshape(1, D)
    y_row = y.reshape(B, 1, Np)

    # ---- generation-aware VMEM budget ---------------------------------------
    cap = _vmem_capacity_bytes()
    g_bytes = np.dtype(g_dtype).itemsize
    mm_bytes = np.dtype(matmul_dtype).itemsize
    n2, nd = Np * Np, Np * D
    vmem_est = (
        2 * 4 * (2 * nd + Np + D + 1)      # pipelined in/out blocks (x2 buffers)
        + nd * (4 + 2 * mm_bytes)          # Xs + matmul-dtype casts of both operands
        + n2 * (4 + g_bytes + 12)          # f32 matmul result + stored G + loop temps
        + (2 << 20))                       # slack for Mosaic internals
    if vmem_est > int(0.85 * cap):
        raise NotImplementedError(
            f"Nminibatch={N} (padded {Np}), D={D} needs ~{vmem_est / 2**20:.0f} MiB "
            f"of VMEM (capacity {cap / 2**20:.0f} MiB); a G-tiled variant is "
            "required before scaling this far.")
    vmem_limit = int(min(cap - (2 << 20), max(vmem_est + (4 << 20), 32 << 20)))

    cost = pl.CostEstimate(
        flops=B * (2 * n2 * D + order * 5 * n2),
        transcendentals=B if binary else 0,
        bytes_accessed=B * 4 * (2 * nd + Np + 1) + 4 * (D + order))

    def run(via_transpose):
        kernel = functools.partial(
            _learnability_kernel, order=order, binary=binary,
            matmul_dtype=matmul_dtype, g_dtype=g_dtype,
            via_transpose=via_transpose)
        out = pl.pallas_call(
            kernel,
            out_shape=jax.ShapeDtypeStruct((B, 1, 1), jnp.float32),
            grid=(B,),
            in_specs=[
                pl.BlockSpec(memory_space=pltpu.MemorySpace.SMEM),      # a (order,)
                pl.BlockSpec((None, Np, D), lambda b: (b, 0, 0)),       # X   (B,Np,D)
                pl.BlockSpec((None, D, Np), lambda b: (b, 0, 0)),       # X^T (B,D,Np)
                pl.BlockSpec((1, D), lambda b: (0, 0)),                 # s_row (1,D)
                pl.BlockSpec((None, 1, Np), lambda b: (b, 0, 0)),       # y_row (B,1,Np)
            ],
            out_specs=pl.BlockSpec((None, 1, 1), lambda b: (b, 0, 0)),
            compiler_params=pltpu.CompilerParams(
                dimension_semantics=("parallel",),
                vmem_limit_bytes=vmem_limit),
            cost_estimate=cost,
        )(a, X, XT, s_row, y_row)
        return jax.block_until_ready(out)

    try:
        return run(True)
    except Exception:
        # TODO(synk): remove once the skinny (N,1)->(1,N) transpose lowering is
        # confirmed on every deployed Mosaic toolchain; fallback uses only the
        # ops already proven in the previous revision.
        return run(False)


def learnability_mb(a, X, s, y, *, binary=False, matmul_dtype=None, g_dtype=None):
    """Single-minibatch forward (matches the torch module: returns (1, 1))."""
    out = learnability_mb_batched(a, X, s, y, binary=binary,
                                  matmul_dtype=matmul_dtype, g_dtype=g_dtype)
    return out[0]


def ref_forward(a, X, s, y, *, binary=False):
    """Pure-JAX reference mirroring the torch code (triudr / triudl / mm)."""
    l = y
    r = y
    z = jnp.zeros((1, 1), jnp.float32)
    for i in range(a.shape[0]):
        if i % 2 == 0:
            U = X * r
            rev = jnp.flip(jnp.cumsum(jnp.flip(U, 0), 0), 0)
            Zr = jnp.zeros_like(X).at[:-1].set(X[:-1] * rev[1:])
            r = Zr @ s
        else:
            U = X * l
            cs = jnp.cumsum(U, 0)
            Zl = jnp.zeros_like(X).at[1:].set(X[1:] * cs[:-1])
            l = Zl @ s
        z = z + a[i] * (l.T @ r)
    if not binary:
        return 1.0 - z
    return 0.5 * (1.0 - jnp.sqrt(jnp.clip(z, 0.0, 1.0)))


if __name__ == "__main__":
    # Module __init__ parameters, built deterministically in-script.
    Nminibatch = 8          # minibatch size (rows of X / y)
    D = 32                  # number of features
    coeff = [1.0, 2.0, 3.0, 4.0]
    a_np = np.array(
        [c / math.comb(Nminibatch, k + 2) for k, c in enumerate(coeff)],
        dtype=np.float32)

    key = jax.random.PRNGKey(0)
    kx, ks, ky = jax.random.split(key, 3)
    X = jax.random.normal(kx, (Nminibatch, D), dtype=jnp.float32) * 0.1
    s = jax.random.uniform(ks, (D, 1), dtype=jnp.float32)
    y = jnp.sign(jax.random.normal(ky, (Nminibatch, 1), dtype=jnp.float32))
    a = jnp.asarray(a_np)

    ref = ref_forward(a, X, s, y, binary=False)
    ref_bin = ref_forward(a, X, s, y, binary=True)

    # 1) forced-f32 path: tight check of the restructured kernel.
    out = jax.block_until_ready(
        learnability_mb(a, X, s, y, matmul_dtype=jnp.float32, g_dtype=jnp.float32))
    np.testing.assert_allclose(np.asarray(out), np.asarray(ref), rtol=2e-5, atol=2e-5)

    # 2) binary path (ramp + safesqrt forward semantics), f32.
    out_bin = jax.block_until_ready(
        learnability_mb(a, X, s, y, binary=True,
                        matmul_dtype=jnp.float32, g_dtype=jnp.float32))
    np.testing.assert_allclose(np.asarray(out_bin), np.asarray(ref_bin),
                               rtol=1e-4, atol=1e-4)

    # 3) chip-default dtypes (bf16 matmul + bf16 G on v6e/v7x, f32 on v5e).
    out_auto = jax.block_until_ready(learnability_mb(a, X, s, y))
    np.testing.assert_allclose(np.asarray(out_auto), np.asarray(ref),
                               rtol=2e-2, atol=2e-2)

    # 4) batched grid path (one minibatch per 'parallel' grid step) with an
    #    N that exercises the zero-row padding (10 -> 16).
    B, Nb = 3, 10
    a2 = jnp.asarray(
        [c / math.comb(Nb, k + 2) for k, c in enumerate(coeff)], dtype=jnp.float32)
    kxb, kyb = jax.random.split(jax.random.PRNGKey(1), 2)
    Xb = jax.random.normal(kxb, (B, Nb, D), dtype=jnp.float32) * 0.1
    yb = jnp.sign(jax.random.normal(kyb, (B, Nb, 1), dtype=jnp.float32))
    outb = jax.block_until_ready(
        learnability_mb_batched(a2, Xb, s, yb,
                                matmul_dtype=jnp.float32, g_dtype=jnp.float32))
    refb = jnp.stack([ref_forward(a2, Xb[b], s, yb[b]) for b in range(B)])
    np.testing.assert_allclose(np.asarray(outb), np.asarray(refb),
                               rtol=2e-5, atol=2e-5)

    print("KERNEL_OK")
</pallas_src>

<mosaic_0001>
module attributes {stable_mosaic.version = 11 : i64} {
  func.func @_learnability_kernel(%arg0: i32, %arg1: memref<4xf32, #tpu.memory_space<smem>>, %arg2: memref<1x8x32xf32, #tpu.memory_space<vmem>>, %arg3: memref<1x32x8xf32, #tpu.memory_space<vmem>>, %arg4: memref<1x32xf32, #tpu.memory_space<vmem>>, %arg5: memref<1x1x8xf32, #tpu.memory_space<vmem>>, %arg6: memref<1x1x1xf32, #tpu.memory_space<vmem>>) attributes {dimension_semantics = [#tpu.dimension_semantics<parallel>], iteration_bounds = array<i64: 1>, scalar_prefetch = 0 : i64, scratch_operands = 0 : i64, tpu.core_type = #tpu.core_type<tc>, window_params = [{transform_indices = @transform_0, window_bounds = array<i64: 4>}, {transform_indices = @transform_1, window_bounds = array<i64: 1, 8, 32>}, {transform_indices = @transform_2, window_bounds = array<i64: 1, 32, 8>}, {pipeline_mode = #tpu.pipeline_mode<synchronous>, transform_indices = @transform_3, window_bounds = array<i64: 1, 32>}, {transform_indices = @transform_4, window_bounds = array<i64: 1, 1, 8>}, {transform_indices = @transform_5, window_bounds = array<i64: 1, 1, 1>}]} {
    %c0 = arith.constant 0 : index
    %c0_0 = arith.constant 0 : index
    %c0_1 = arith.constant 0 : index
    %0 = vector.load %arg2[%c0, %c0_0, %c0_1] : memref<1x8x32xf32, #tpu.memory_space<vmem>>, vector<1x8x32xf32>
    %1 = vector.shape_cast %0 : vector<1x8x32xf32> to vector<8x32xf32>
    %c0_2 = arith.constant 0 : index
    %c0_3 = arith.constant 0 : index
    %c0_4 = arith.constant 0 : index
    %2 = vector.load %arg3[%c0_2, %c0_3, %c0_4] : memref<1x32x8xf32, #tpu.memory_space<vmem>>, vector<1x32x8xf32>
    %3 = vector.shape_cast %2 : vector<1x32x8xf32> to vector<32x8xf32>
    %c0_5 = arith.constant 0 : index
    %c0_6 = arith.constant 0 : index
    %4 = vector.load %arg4[%c0_5, %c0_6] : memref<1x32xf32, #tpu.memory_space<vmem>>, vector<1x32xf32>
    %c0_7 = arith.constant 0 : index
    %c0_8 = arith.constant 0 : index
    %c0_9 = arith.constant 0 : index
    %5 = vector.load %arg5[%c0_7, %c0_8, %c0_9] : memref<1x1x8xf32, #tpu.memory_space<vmem>>, vector<1x1x8xf32>
    %6 = vector.shape_cast %5 : vector<1x1x8xf32> to vector<1x8xf32>
    %7 = vector.broadcast %4 : vector<1x32xf32> to vector<8x32xf32>
    %8 = arith.mulf %1, %7 : vector<8x32xf32>
    %cst = arith.constant dense<0.000000e+00> : vector<8x8xf32>
    %9 = tpu.matmul %8, %3, %cst {dimension_numbers = #tpu.dot_dimension_numbers<[1], [0], [0], [1], [0, 0, 1, 1], [], []>} : vector<8x32xf32>, vector<32x8xf32>, vector<8x8xf32> -> vector<8x8xf32>
    %cst_10 = arith.constant 0.000000e+00 : f32
    %10 = vector.broadcast %cst_10 : f32 to vector<1x1xf32>
    %11 = tpu.iota {dimensions = array<i32: 0>} : vector<8x8xi32>
    %12 = tpu.iota {dimensions = array<i32: 1>} : vector<8x8xi32>
    %13 = arith.cmpi sgt, %12, %11 : vector<8x8xi32>
    %cst_11 = arith.constant 0.000000e+00 : f32
    %14 = vector.broadcast %cst_11 : f32 to vector<8x8xf32>
    %15 = arith.select %13, %9, %14 : vector<8x8xi1>, vector<8x8xf32>
    %16 = vector.broadcast %6 : vector<1x8xf32> to vector<8x8xf32>
    %17 = arith.mulf %15, %16 : vector<8x8xf32>
    %cst_12 = arith.constant dense<0.000000e+00> : vector<8xf32>
    %18 = vector.multi_reduction <add>, %17, %cst_12 [1] : vector<8x8xf32> to vector<8xf32>
    %19 = vector.shape_cast %18 : vector<8xf32> to vector<8x1xf32>
    %20 = tpu.transpose %19, [1, 0] : vector<8x1xf32> -> vector<1x8xf32>
    %21 = arith.mulf %6, %20 : vector<1x8xf32>
    %cst_13 = arith.constant dense<0.000000e+00> : vector<1xf32>
    %22 = vector.multi_reduction <add>, %21, %cst_13 [1] : vector<1x8xf32> to vector<1xf32>
    %23 = vector.shape_cast %22 : vector<1xf32> to vector<1x1xf32>
    %c0_14 = arith.constant 0 : index
    %24 = memref.load %arg1[%c0_14] : memref<4xf32, #tpu.memory_space<smem>>
    %25 = vector.broadcast %24 : f32 to vector<1x1xf32>
    %26 = arith.mulf %25, %23 : vector<1x1xf32>
    %27 = arith.addf %10, %26 : vector<1x1xf32>
    %28 = tpu.iota {dimensions = array<i32: 0>} : vector<8x8xi32>
    %29 = tpu.iota {dimensions = array<i32: 1>} : vector<8x8xi32>
    %30 = arith.cmpi slt, %29, %28 : vector<8x8xi32>
    %cst_15 = arith.constant 0.000000e+00 : f32
    %31 = vector.broadcast %cst_15 : f32 to vector<8x8xf32>
    %32 = arith.select %30, %9, %31 : vector<8x8xi1>, vector<8x8xf32>
    %33 = vector.broadcast %6 : vector<1x8xf32> to vector<8x8xf32>
    %34 = arith.mulf %32, %33 : vector<8x8xf32>
    %cst_16 = arith.constant dense<0.000000e+00> : vector<8xf32>
    %35 = vector.multi_reduction <add>, %34, %cst_16 [1] : vector<8x8xf32> to vector<8xf32>
    %36 = vector.shape_cast %35 : vector<8xf32> to vector<8x1xf32>
    %37 = tpu.transpose %36, [1, 0] : vector<8x1xf32> -> vector<1x8xf32>
    %38 = arith.mulf %37, %20 : vector<1x8xf32>
    %cst_17 = arith.constant dense<0.000000e+00> : vector<1xf32>
    %39 = vector.multi_reduction <add>, %38, %cst_17 [1] : vector<1x8xf32> to vector<1xf32>
    %40 = vector.shape_cast %39 : vector<1xf32> to vector<1x1xf32>
    %c1 = arith.constant 1 : index
    %41 = memref.load %arg1[%c1] : memref<4xf32, #tpu.memory_space<smem>>
    %42 = vector.broadcast %41 : f32 to vector<1x1xf32>
    %43 = arith.mulf %42, %40 : vector<1x1xf32>
    %44 = arith.addf %27, %43 : vector<1x1xf32>
    %45 = tpu.iota {dimensions = array<i32: 0>} : vector<8x8xi32>
    %46 = tpu.iota {dimensions = array<i32: 1>} : vector<8x8xi32>
    %47 = arith.cmpi sgt, %46, %45 : vector<8x8xi32>
    %cst_18 = arith.constant 0.000000e+00 : f32
    %48 = vector.broadcast %cst_18 : f32 to vector<8x8xf32>
    %49 = arith.select %47, %9, %48 : vector<8x8xi1>, vector<8x8xf32>
    %50 = vector.broadcast %20 : vector<1x8xf32> to vector<8x8xf32>
    %51 = arith.mulf %49, %50 : vector<8x8xf32>
    %cst_19 = arith.constant dense<0.000000e+00> : vector<8xf32>
    %52 = vector.multi_reduction <add>, %51, %cst_19 [1] : vector<8x8xf32> to vector<8xf32>
    %53 = vector.shape_cast %52 : vector<8xf32> to vector<8x1xf32>
    %54 = tpu.transpose %53, [1, 0] : vector<8x1xf32> -> vector<1x8xf32>
    %55 = arith.mulf %37, %54 : vector<1x8xf32>
    %cst_20 = arith.constant dense<0.000000e+00> : vector<1xf32>
    %56 = vector.multi_reduction <add>, %55, %cst_20 [1] : vector<1x8xf32> to vector<1xf32>
    %57 = vector.shape_cast %56 : vector<1xf32> to vector<1x1xf32>
    %c2 = arith.constant 2 : index
    %58 = memref.load %arg1[%c2] : memref<4xf32, #tpu.memory_space<smem>>
    %59 = vector.broadcast %58 : f32 to vector<1x1xf32>
    %60 = arith.mulf %59, %57 : vector<1x1xf32>
    %61 = arith.addf %44, %60 : vector<1x1xf32>
    %62 = tpu.iota {dimensions = array<i32: 0>} : vector<8x8xi32>
    %63 = tpu.iota {dimensions = array<i32: 1>} : vector<8x8xi32>
    %64 = arith.cmpi slt, %63, %62 : vector<8x8xi32>
    %cst_21 = arith.constant 0.000000e+00 : f32
    %65 = vector.broadcast %cst_21 : f32 to vector<8x8xf32>
    %66 = arith.select %64, %9, %65 : vector<8x8xi1>, vector<8x8xf32>
    %67 = vector.broadcast %37 : vector<1x8xf32> to vector<8x8xf32>
    %68 = arith.mulf %66, %67 : vector<8x8xf32>
    %cst_22 = arith.constant dense<0.000000e+00> : vector<8xf32>
    %69 = vector.multi_reduction <add>, %68, %cst_22 [1] : vector<8x8xf32> to vector<8xf32>
    %70 = vector.shape_cast %69 : vector<8xf32> to vector<8x1xf32>
    %71 = tpu.transpose %70, [1, 0] : vector<8x1xf32> -> vector<1x8xf32>
    %72 = arith.mulf %71, %54 : vector<1x8xf32>
    %cst_23 = arith.constant dense<0.000000e+00> : vector<1xf32>
    %73 = vector.multi_reduction <add>, %72, %cst_23 [1] : vector<1x8xf32> to vector<1xf32>
    %74 = vector.shape_cast %73 : vector<1xf32> to vector<1x1xf32>
    %c3 = arith.constant 3 : index
    %75 = memref.load %arg1[%c3] : memref<4xf32, #tpu.memory_space<smem>>
    %76 = vector.broadcast %75 : f32 to vector<1x1xf32>
    %77 = arith.mulf %76, %74 : vector<1x1xf32>
    %78 = arith.addf %61, %77 : vector<1x1xf32>
    %cst_24 = arith.constant 1.000000e+00 : f32
    %79 = vector.broadcast %cst_24 : f32 to vector<1x1xf32>
    %80 = arith.subf %79, %78 : vector<1x1xf32>
    %c0_25 = arith.constant 0 : index
    %c0_26 = arith.constant 0 : index
    %c0_27 = arith.constant 0 : index
    %81 = vector.load %arg6[%c0_25, %c0_26, %c0_27] : memref<1x1x1xf32, #tpu.memory_space<vmem>>, vector<1x1x1xf32>
    %82 = vector.shape_cast %81 : vector<1x1x1xf32> to vector<1x1xf32>
    %83 = vector.shape_cast %80 : vector<1x1xf32> to vector<1x1x1xf32>
    tpu.vector_store %arg6[%c0_25, %c0_26, %c0_27], %83 {strides = array<i32>} : memref<1x1x1xf32, #tpu.memory_space<vmem>>, vector<1x1x1xf32>,
    return
  }
  func.func @transform_0(%arg0: i32) -> i32 {
    %c0_i32 = arith.constant 0 : i32
    %c0_i32_0 = arith.constant 0 : i32
    return %c0_i32 : i32
  }
  func.func @transform_1(%arg0: i32) -> (i32, i32, i32) {
    %c0_i32 = arith.constant 0 : i32
    %c0_i32_0 = arith.constant 0 : i32
    %c0_i32_1 = arith.constant 0 : i32
    return %arg0, %c0_i32, %c0_i32_0 : i32, i32, i32
  }
  func.func @transform_2(%arg0: i32) -> (i32, i32, i32) {
    %c0_i32 = arith.constant 0 : i32
    %c0_i32_0 = arith.constant 0 : i32
    %c0_i32_1 = arith.constant 0 : i32
    return %arg0, %c0_i32, %c0_i32_0 : i32, i32, i32
  }
  func.func @transform_3(%arg0: i32) -> (i32, i32) {
    %c0_i32 = arith.constant 0 : i32
    %c0_i32_0 = arith.constant 0 : i32
    %c0_i32_1 = arith.constant 0 : i32
    return %c0_i32, %c0_i32_0 : i32, i32
  }
  func.func @transform_4(%arg0: i32) -> (i32, i32, i32) {
    %c0_i32 = arith.constant 0 : i32
    %c0_i32_0 = arith.constant 0 : i32
    %c0_i32_1 = arith.constant 0 : i32
    return %arg0, %c0_i32, %c0_i32_0 : i32, i32, i32
  }
  func.func @transform_5(%arg0: i32) -> (i32, i32, i32) {
    %c0_i32 = arith.constant 0 : i32
    %c0_i32_0 = arith.constant 0 : i32
    %c0_i32_1 = arith.constant 0 : i32
    return %arg0, %c0_i32, %c0_i32_0 : i32, i32, i32
  }
}

module attributes {stable_mosaic.version = 11 : i64} {
  func.func @_learnability_kernel(%arg0: i32, %arg1: memref<4xf32, #tpu.memory_space<smem>>, %arg2: memref<1x8x32xf32, #tpu.memory_space<vmem>>, %arg3: memref<1x32x8xf32, #tpu.memory_space<vmem>>, %arg4: memref<1x32xf32, #tpu.memory_space<vmem>>, %arg5: memref<1x1x8xf32, #tpu.memory_space<vmem>>, %arg6: memref<1x1x1xf32, #tpu.memory_space<vmem>>) attributes {dimension_semantics = [#tpu.dimension_semantics<parallel>], iteration_bounds = array<i64: 1>, scalar_prefetch = 0 : i64, scratch_operands = 0 : i64, tpu.core_type = #tpu.core_type<tc>, window_params = [{transform_indices = @transform_0, window_bounds = array<i64: 4>}, {transform_indices = @transform_1, window_bounds = array<i64: 1, 8, 32>}, {transform_indices = @transform_2, window_bounds = array<i64: 1, 32, 8>}, {pipeline_mode = #tpu.pipeline_mode<synchronous>, transform_indices = @transform_3, window_bounds = array<i64: 1, 32>}, {transform_indices = @transform_4, window_bounds = array<i64: 1, 1, 8>}, {transform_indices = @transform_5, window_bounds = array<i64: 1, 1, 1>}]} {
    %c0 = arith.constant 0 : index
    %c0_0 = arith.constant 0 : index
    %c0_1 = arith.constant 0 : index
    %0 = vector.load %arg2[%c0, %c0_0, %c0_1] : memref<1x8x32xf32, #tpu.memory_space<vmem>>, vector<1x8x32xf32>
    %1 = vector.shape_cast %0 : vector<1x8x32xf32> to vector<8x32xf32>
    %c0_2 = arith.constant 0 : index
    %c0_3 = arith.constant 0 : index
    %c0_4 = arith.constant 0 : index
    %2 = vector.load %arg3[%c0_2, %c0_3, %c0_4] : memref<1x32x8xf32, #tpu.memory_space<vmem>>, vector<1x32x8xf32>
    %3 = vector.shape_cast %2 : vector<1x32x8xf32> to vector<32x8xf32>
    %c0_5 = arith.constant 0 : index
    %c0_6 = arith.constant 0 : index
    %4 = vector.load %arg4[%c0_5, %c0_6] : memref<1x32xf32, #tpu.memory_space<vmem>>, vector<1x32xf32>
    %c0_7 = arith.constant 0 : index
    %c0_8 = arith.constant 0 : index
    %c0_9 = arith.constant 0 : index
    %5 = vector.load %arg5[%c0_7, %c0_8, %c0_9] : memref<1x1x8xf32, #tpu.memory_space<vmem>>, vector<1x1x8xf32>
    %6 = vector.shape_cast %5 : vector<1x1x8xf32> to vector<1x8xf32>
    %7 = vector.broadcast %4 : vector<1x32xf32> to vector<8x32xf32>
    %8 = arith.mulf %1, %7 : vector<8x32xf32>
    %cst = arith.constant dense<0.000000e+00> : vector<8x8xf32>
    %9 = tpu.matmul %8, %3, %cst {dimension_numbers = #tpu.dot_dimension_numbers<[1], [0], [0], [1], [0, 0, 1, 1], [], []>} : vector<8x32xf32>, vector<32x8xf32>, vector<8x8xf32> -> vector<8x8xf32>
    %cst_10 = arith.constant 0.000000e+00 : f32
    %10 = vector.broadcast %cst_10 : f32 to vector<1x1xf32>
    %11 = tpu.iota {dimensions = array<i32: 0>} : vector<8x8xi32>
    %12 = tpu.iota {dimensions = array<i32: 1>} : vector<8x8xi32>
    %13 = arith.cmpi sgt, %12, %11 : vector<8x8xi32>
    %cst_11 = arith.constant 0.000000e+00 : f32
    %14 = vector.broadcast %cst_11 : f32 to vector<8x8xf32>
    %15 = arith.select %13, %9, %14 : vector<8x8xi1>, vector<8x8xf32>
    %16 = vector.broadcast %6 : vector<1x8xf32> to vector<8x8xf32>
    %17 = arith.mulf %15, %16 : vector<8x8xf32>
    %cst_12 = arith.constant dense<0.000000e+00> : vector<8xf32>
    %18 = vector.multi_reduction <add>, %17, %cst_12 [1] : vector<8x8xf32> to vector<8xf32>
    %19 = vector.shape_cast %18 : vector<8xf32> to vector<8x1xf32>
    %20 = tpu.iota {dimensions = array<i32: 0>} : vector<8x8xi32>
    %21 = tpu.iota {dimensions = array<i32: 1>} : vector<8x8xi32>
    %22 = arith.cmpi eq, %20, %21 : vector<8x8xi32>
    %cst_13 = arith.constant 0.000000e+00 : f32
    %23 = vector.shape_cast %19 : vector<8x1xf32> to vector<8x1xf32>
    %24 = vector.broadcast %23 : vector<8x1xf32> to vector<8x8xf32>
    %25 = vector.broadcast %cst_13 : f32 to vector<8x8xf32>
    %26 = arith.select %22, %24, %25 : vector<8x8xi1>, vector<8x8xf32>
    %cst_14 = arith.constant dense<0.000000e+00> : vector<8xf32>
    %27 = vector.multi_reduction <add>, %26, %cst_14 [0] : vector<8x8xf32> to vector<8xf32>
    %28 = vector.shape_cast %27 : vector<8xf32> to vector<1x8xf32>
    %29 = arith.mulf %6, %28 : vector<1x8xf32>
    %cst_15 = arith.constant dense<0.000000e+00> : vector<1xf32>
    %30 = vector.multi_reduction <add>, %29, %cst_15 [1] : vector<1x8xf32> to vector<1xf32>
    %31 = vector.shape_cast %30 : vector<1xf32> to vector<1x1xf32>
    %c0_16 = arith.constant 0 : index
    %32 = memref.load %arg1[%c0_16] : memref<4xf32, #tpu.memory_space<smem>>
    %33 = vector.broadcast %32 : f32 to vector<1x1xf32>
    %34 = arith.mulf %33, %31 : vector<1x1xf32>
    %35 = arith.addf %10, %34 : vector<1x1xf32>
    %36 = tpu.iota {dimensions = array<i32: 0>} : vector<8x8xi32>
    %37 = tpu.iota {dimensions = array<i32: 1>} : vector<8x8xi32>
    %38 = arith.cmpi slt, %37, %36 : vector<8x8xi32>
    %cst_17 = arith.constant 0.000000e+00 : f32
    %39 = vector.broadcast %cst_17 : f32 to vector<8x8xf32>
    %40 = arith.select %38, %9, %39 : vector<8x8xi1>, vector<8x8xf32>
    %41 = vector.broadcast %6 : vector<1x8xf32> to vector<8x8xf32>
    %42 = arith.mulf %40, %41 : vector<8x8xf32>
    %cst_18 = arith.constant dense<0.000000e+00> : vector<8xf32>
    %43 = vector.multi_reduction <add>, %42, %cst_18 [1] : vector<8x8xf32> to vector<8xf32>
    %44 = vector.shape_cast %43 : vector<8xf32> to vector<8x1xf32>
    %45 = tpu.iota {dimensions = array<i32: 0>} : vector<8x8xi32>
    %46 = tpu.iota {dimensions = array<i32: 1>} : vector<8x8xi32>
    %47 = arith.cmpi eq, %45, %46 : vector<8x8xi32>
    %cst_19 = arith.constant 0.000000e+00 : f32
    %48 = vector.shape_cast %44 : vector<8x1xf32> to vector<8x1xf32>
    %49 = vector.broadcast %48 : vector<8x1xf32> to vector<8x8xf32>
    %50 = vector.broadcast %cst_19 : f32 to vector<8x8xf32>
    %51 = arith.select %47, %49, %50 : vector<8x8xi1>, vector<8x8xf32>
    %cst_20 = arith.constant dense<0.000000e+00> : vector<8xf32>
    %52 = vector.multi_reduction <add>, %51, %cst_20 [0] : vector<8x8xf32> to vector<8xf32>
    %53 = vector.shape_cast %52 : vector<8xf32> to vector<1x8xf32>
    %54 = arith.mulf %53, %28 : vector<1x8xf32>
    %cst_21 = arith.constant dense<0.000000e+00> : vector<1xf32>
    %55 = vector.multi_reduction <add>, %54, %cst_21 [1] : vector<1x8xf32> to vector<1xf32>
    %56 = vector.shape_cast %55 : vector<1xf32> to vector<1x1xf32>
    %c1 = arith.constant 1 : index
    %57 = memref.load %arg1[%c1] : memref<4xf32, #tpu.memory_space<smem>>
    %58 = vector.broadcast %57 : f32 to vector<1x1xf32>
    %59 = arith.mulf %58, %56 : vector<1x1xf32>
    %60 = arith.addf %35, %59 : vector<1x1xf32>
    %61 = tpu.iota {dimensions = array<i32: 0>} : vector<8x8xi32>
    %62 = tpu.iota {dimensions = array<i32: 1>} : vector<8x8xi32>
    %63 = arith.cmpi sgt, %62, %61 : vector<8x8xi32>
    %cst_22 = arith.constant 0.000000e+00 : f32
    %64 = vector.broadcast %cst_22 : f32 to vector<8x8xf32>
    %65 = arith.select %63, %9, %64 : vector<8x8xi1>, vector<8x8xf32>
    %66 = vector.broadcast %28 : vector<1x8xf32> to vector<8x8xf32>
    %67 = arith.mulf %65, %66 : vector<8x8xf32>
    %cst_23 = arith.constant dense<0.000000e+00> : vector<8xf32>
    %68 = vector.multi_reduction <add>, %67, %cst_23 [1] : vector<8x8xf32> to vector<8xf32>
    %69 = vector.shape_cast %68 : vector<8xf32> to vector<8x1xf32>
    %70 = tpu.iota {dimensions = array<i32: 0>} : vector<8x8xi32>
    %71 = tpu.iota {dimensions = array<i32: 1>} : vector<8x8xi32>
    %72 = arith.cmpi eq, %70, %71 : vector<8x8xi32>
    %cst_24 = arith.constant 0.000000e+00 : f32
    %73 = vector.shape_cast %69 : vector<8x1xf32> to vector<8x1xf32>
    %74 = vector.broadcast %73 : vector<8x1xf32> to vector<8x8xf32>
    %75 = vector.broadcast %cst_24 : f32 to vector<8x8xf32>
    %76 = arith.select %72, %74, %75 : vector<8x8xi1>, vector<8x8xf32>
    %cst_25 = arith.constant dense<0.000000e+00> : vector<8xf32>
    %77 = vector.multi_reduction <add>, %76, %cst_25 [0] : vector<8x8xf32> to vector<8xf32>
    %78 = vector.shape_cast %77 : vector<8xf32> to vector<1x8xf32>
    %79 = arith.mulf %53, %78 : vector<1x8xf32>
    %cst_26 = arith.constant dense<0.000000e+00> : vector<1xf32>
    %80 = vector.multi_reduction <add>, %79, %cst_26 [1] : vector<1x8xf32> to vector<1xf32>
    %81 = vector.shape_cast %80 : vector<1xf32> to vector<1x1xf32>
    %c2 = arith.constant 2 : index
    %82 = memref.load %arg1[%c2] : memref<4xf32, #tpu.memory_space<smem>>
    %83 = vector.broadcast %82 : f32 to vector<1x1xf32>
    %84 = arith.mulf %83, %81 : vector<1x1xf32>
    %85 = arith.addf %60, %84 : vector<1x1xf32>
    %86 = tpu.iota {dimensions = array<i32: 0>} : vector<8x8xi32>
    %87 = tpu.iota {dimensions = array<i32: 1>} : vector<8x8xi32>
    %88 = arith.cmpi slt, %87, %86 : vector<8x8xi32>
    %cst_27 = arith.constant 0.000000e+00 : f32
    %89 = vector.broadcast %cst_27 : f32 to vector<8x8xf32>
    %90 = arith.select %88, %9, %89 : vector<8x8xi1>, vector<8x8xf32>
    %91 = vector.broadcast %53 : vector<1x8xf32> to vector<8x8xf32>
    %92 = arith.mulf %90, %91 : vector<8x8xf32>
    %cst_28 = arith.constant dense<0.000000e+00> : vector<8xf32>
    %93 = vector.multi_reduction <add>, %92, %cst_28 [1] : vector<8x8xf32> to vector<8xf32>
    %94 = vector.shape_cast %93 : vector<8xf32> to vector<8x1xf32>
    %95 = tpu.iota {dimensions = array<i32: 0>} : vector<8x8xi32>
    %96 = tpu.iota {dimensions = array<i32: 1>} : vector<8x8xi32>
    %97 = arith.cmpi eq, %95, %96 : vector<8x8xi32>
    %cst_29 = arith.constant 0.000000e+00 : f32
    %98 = vector.shape_cast %94 : vector<8x1xf32> to vector<8x1xf32>
    %99 = vector.broadcast %98 : vector<8x1xf32> to vector<8x8xf32>
    %100 = vector.broadcast %cst_29 : f32 to vector<8x8xf32>
    %101 = arith.select %97, %99, %100 : vector<8x8xi1>, vector<8x8xf32>
    %cst_30 = arith.constant dense<0.000000e+00> : vector<8xf32>
    %102 = vector.multi_reduction <add>, %101, %cst_30 [0] : vector<8x8xf32> to vector<8xf32>
    %103 = vector.shape_cast %102 : vector<8xf32> to vector<1x8xf32>
    %104 = arith.mulf %103, %78 : vector<1x8xf32>
    %cst_31 = arith.constant dense<0.000000e+00> : vector<1xf32>
    %105 = vector.multi_reduction <add>, %104, %cst_31 [1] : vector<1x8xf32> to vector<1xf32>
    %106 = vector.shape_cast %105 : vector<1xf32> to vector<1x1xf32>
    %c3 = arith.constant 3 : index
    %107 = memref.load %arg1[%c3] : memref<4xf32, #tpu.memory_space<smem>>
    %108 = vector.broadcast %107 : f32 to vector<1x1xf32>
    %109 = arith.mulf %108, %106 : vector<1x1xf32>
    %110 = arith.addf %85, %109 : vector<1x1xf32>
    %cst_32 = arith.constant 1.000000e+00 : f32
    %111 = vector.broadcast %cst_32 : f32 to vector<1x1xf32>
    %112 = arith.subf %111, %110 : vector<1x1xf32>
    %c0_33 = arith.constant 0 : index
    %c0_34 = arith.constant 0 : index
    %c0_35 = arith.constant 0 : index
    %113 = vector.load %arg6[%c0_33, %c0_34, %c0_35] : memref<1x1x1xf32, #tpu.memory_space<vmem>>, vector<1x1x1xf32>
    %114 = vector.shape_cast %113 : vector<1x1x1xf32> to vector<1x1xf32>
    %115 = vector.shape_cast %112 : vector<1x1xf32> to vector<1x1x1xf32>
    tpu.vector_store %arg6[%c0_33, %c0_34, %c0_35], %115 {strides = array<i32>} : memref<1x1x1xf32, #tpu.memory_space<vmem>>, vector<1x1x1xf32>,
    return
  }
  func.func @transform_0(%arg0: i32) -> i32 {
    %c0_i32 = arith.constant 0 : i32
    %c0_i32_0 = arith.constant 0 : i32
    return %c0_i32 : i32
  }
  func.func @transform_1(%arg0: i32) -> (i32, i32, i32) {
    %c0_i32 = arith.constant 0 : i32
    %c0_i32_0 = arith.constant 0 : i32
    %c0_i32_1 = arith.constant 0 : i32
    return %arg0, %c0_i32, %c0_i32_0 : i32, i32, i32
  }
  func.func @transform_2(%arg0: i32) -> (i32, i32, i32) {
    %c0_i32 = arith.constant 0 : i32
    %c0_i32_0 = arith.constant 0 : i32
    %c0_i32_1 = arith.constant 0 : i32
    return %arg0, %c0_i32, %c0_i32_0 : i32, i32, i32
  }
  func.func @transform_3(%arg0: i32) -> (i32, i32) {
    %c0_i32 = arith.constant 0 : i32
    %c0_i32_0 = arith.constant 0 : i32
    %c0_i32_1 = arith.constant 0 : i32
    return %c0_i32, %c0_i32_0 : i32, i32
  }
  func.func @transform_4(%arg0: i32) -> (i32, i32, i32) {
    %c0_i32 = arith.constant 0 : i32
    %c0_i32_0 = arith.constant 0 : i32
    %c0_i32_1 = arith.constant 0 : i32
    return %arg0, %c0_i32, %c0_i32_0 : i32, i32, i32
  }
  func.func @transform_5(%arg0: i32) -> (i32, i32, i32) {
    %c0_i32 = arith.constant 0 : i32
    %c0_i32_0 = arith.constant 0 : i32
    %c0_i32_1 = arith.constant 0 : i32
    return %arg0, %c0_i32, %c0_i32_0 : i32, i32, i32
  }
}

</mosaic_0001>

<llo_original>
// kernel: tpu_custom_call.1
$region0: #{tpu_custom_call.1}
  #allocation0 [shape = 'u32[]', space=smem, size = 0x4, offset = 0x4, fixed_abs, tag = 'smem constant byte address 0x4 - core index']
  #allocation1 [shape = 'u32[72,128]{1,0:T(1,128)}', space=vmem, size = 0x9000, scoped, tag = 'internal scratch']
  %s0 = inlined_call_operand.vmem [shape: f32[4], index: 0, kind: input, shape index: {}]
  %s1 = inlined_call_operand.vmem [shape: f32[1,8,32], index: 1, kind: input, shape index: {}]
  %s2 = inlined_call_operand.vmem [shape: f32[1,32,8], index: 2, kind: input, shape index: {}]
  %s3 = inlined_call_operand.vmem [shape: f32[1,32], index: 3, kind: input, shape index: {}]
  %s4 = inlined_call_operand.vmem [shape: f32[1,1,8], index: 4, kind: input, shape index: {}]
  %s5 = inlined_call_operand.hbm [shape: f32[1,1,1], index: 5, kind: output, shape index: {}]
  %s6 = sld [smem:[#allocation0]]
  $region34: #{tpu_custom_call.1} parent=0
    _
  %s8 = ssub.s32 1, %s6
  %s9 = scalar_select 0, %s8, %s6
  $region1: #{tpu_custom_call.1} parent=0
    #allocation2 [shape = 'u8[512]{0}', space=smem, size = 0x200, scoped, tag = 'input window, operand 0, single buffered']
    #allocation3 [shape = 's32[1]{0}', space=sflag, size = 0x4, scoped, tag = 'scoped memory for tpu_custom_call.1']
    #allocation4 [shape = 's32[1]{0}', space=sflag, size = 0x4, scoped, tag = 'scoped memory for tpu_custom_call.1']
    #allocation5 [shape = 'u8[512]{0}', space=vmem, size = 0x400, scoped, tag = 'output window, operand 0, single buffered']
    %10 = vsyncpa [#allocation4], 0
    %11 = vsyncpa [#allocation3], 0
    // Predicated region
    $region2: #{tpu_custom_call.1} parent=1 // pred_check
      _
    $region3: #{tpu_custom_call.1} parent=1 // pred_check_branch
      %13 = sbr.rel (0) target = $region5
    $region4: #{tpu_custom_call.1} parent=1 // pred_region
      %15 = vsyncadd [#allocation4], 0
      %s17 = sshll.u32 %s0, 4
      %s18 = int_to_ptr.vmem [resolvable:$true] %s17
      %20 = dma.vmem_to_smem %s18, 16, [#allocation2], [#allocation4]
    $region5: #{tpu_custom_call.1} parent=1 // pred_fallthru
      _
    // Predicated region
    $region6: #{tpu_custom_call.1} parent=1 // pred_check
      _
    $region7: #{tpu_custom_call.1} parent=1 // pred_check_branch
      %22 = sbr.rel (0) target = $region9
    $region8: #{tpu_custom_call.1} parent=1 // pred_region
      _
    $region9: #{tpu_custom_call.1} parent=1 // pred_fallthru
      _
    // Predicated region
    $region10: #{tpu_custom_call.1} parent=1 // pred_check
      _
    $region11: #{tpu_custom_call.1} parent=1 // pred_check_branch
      %24 = sbr.rel (0) target = $region13
    $region12: #{tpu_custom_call.1} parent=1 // pred_region
      _
    $region13: #{tpu_custom_call.1} parent=1 // pred_fallthru
      _
    // Predicated region
    $region14: #{tpu_custom_call.1} parent=1 // pred_check
      _
    $region15: #{tpu_custom_call.1} parent=1 // pred_check_branch
      %26 = sbr.rel (0) target = $region17
    $region16: #{tpu_custom_call.1} parent=1 // pred_region
      _
    $region17: #{tpu_custom_call.1} parent=1 // pred_fallthru
      _
    // Predicated region
    $region18: #{tpu_custom_call.1} parent=1 // pred_check
      _
    $region19: #{tpu_custom_call.1} parent=1 // pred_check_branch
      %28 = sbr.rel (0) target = $region21
    $region20: #{tpu_custom_call.1} parent=1 // pred_region
      _
    $region21: #{tpu_custom_call.1} parent=1 // pred_fallthru
      _
    // Predicated region
    $region22: #{tpu_custom_call.1} parent=1 // pred_check
      _
    $region23: #{tpu_custom_call.1} parent=1 // pred_check_branch
      %30 = sbr.rel (0) target = $region25
    $region24: #{tpu_custom_call.1} parent=1 // pred_region
      %32 = dma.done [#allocation4], 16
    $region25: #{tpu_custom_call.1} parent=1 // pred_fallthru
      _
    %33 = sfence
    %v34 = vld [vmem:[%s1] sm:$0xff]
    %v35 = vld [vmem:[%s2] sm:$0xff]
    %v36 = vld [vmem:[%s2 + $0x8] sm:$0xff]
    %v37 = vld [vmem:[%s2 + $0x10] sm:$0xff]
    %v38 = vld [vmem:[%s2 + $0x18] sm:$0xff]
    %v39 = vld [vmem:[%s3] sm:$0x1]
    %v40 = vld [vmem:[%s4] sm:$0x1]
    %v42 = vperm.slane %v39, 0
    %v44 = vmul.f32 %v34, %v42
    %vm45 = vcmask 261120
    %v47 = vsel %vm45, %v44, 0
    %49 = vmatpush.msra.mxu0 0.0
    %50 = vmatpush.msra.mxu0 0.0
    %51 = vmatpush.msra.mxu0 0.0
    %52 = vmatpush.msra.mxu0 0.0
    %53 = vmatpush.msra.mxu0 0.0
    %54 = vmatpush.msra.mxu0 0.0
    %55 = vmatpush.msra.mxu0 0.0
    %56 = vmatpush.msra.mxu0 0.0
    %57 = vmatpush.msra.mxu0 0.0
    %58 = vmatpush.msra.mxu0 0.0
    %59 = vmatpush.msra.mxu0 0.0
    %60 = vmatpush.msra.mxu0 0.0
    %61 = vmatpush.msra.mxu0 %v38
    %62 = vmatpush.msra.mxu0 %v37
    %63 = vmatpush.msra.mxu0 %v36
    %64 = vmatpush.msra.mxu0 %v35
    %65 = vmatmul.f32.gmra.mxu0 %v47
    %v66 = vpop.f32.mrf.mxu0
    %v67 = vadd.f32 0.0, %v66
    %68 = vdwg.mxu0
    %v69 = vlaneseq
    %v70 = vshrl.u32 %v69, 7
    %v71 = vlaneseq
    %v72 = vand.u32 %v71, 127
    %vm73 = vcmp.gt.s32.totalorder %v72, %v70
    %v74 = vsel %vm73, %v67, 0.0
    %v76 = vperm.slane %v40, 0
    %v78 = vmul.f32 %v74, %v76
    %vm79 = vcmask 64512
    %v80 = vsel %vm79, %v78, 0.0
    %81 = vadd.xlane.f32.xlu0 %v80
    %v82 = vpop.xlane.xlu0 %81
    %83 = vxpose.xlu0.b32.start [1/16] %v82, 128
    %84 = vxpose.xlu0.b32.cont [2/16] 0.0, 128
    %85 = vxpose.xlu0.b32.cont [3/16] 0.0, 128
    %86 = vxpose.xlu0.b32.cont [4/16] 0.0, 128
    %87 = vxpose.xlu0.b32.cont [5/16] 0.0, 128
    %88 = vxpose.xlu0.b32.cont [6/16] 0.0, 128
    %89 = vxpose.xlu0.b32.cont [7/16] 0.0, 128
    %90 = vxpose.xlu0.b32.cont [8/16] 0.0, 128
    %91 = vxpose.xlu0.b32.cont [9/16] 0.0, 128
    %92 = vxpose.xlu0.b32.cont [10/16] 0.0, 128
    %93 = vxpose.xlu0.b32.cont [11/16] 0.0, 128
    %94 = vxpose.xlu0.b32.cont [12/16] 0.0, 128
    %95 = vxpose.xlu0.b32.cont [13/16] 0.0, 128
    %96 = vxpose.xlu0.b32.cont [14/16] 0.0, 128
    %97 = vxpose.xlu0.b32.cont [15/16] 0.0, 128
    %98 = vxpose.xlu0.b32.end [16/16] 0.0, 128
    %v99 = vpop.trf.xlu0
    %v100 = vpop.trf.xlu0
    %v101 = vpop.trf.xlu0
    %v102 = vpop.trf.xlu0
    %v103 = vpop.trf.xlu0
    %v104 = vpop.trf.xlu0
    %v105 = vpop.trf.xlu0
    %v106 = vpop.trf.xlu0
    %v107 = vpop.trf.xlu0
    %v108 = vpop.trf.xlu0
    %v109 = vpop.trf.xlu0
    %v110 = vpop.trf.xlu0
    %v111 = vpop.trf.xlu0
    %v112 = vpop.trf.xlu0
    %v113 = vpop.trf.xlu0
    %v114 = vpop.trf.xlu0
    %v115 = vmul.f32 %v40, %v99
    %vm116 = vcmask 57344
    %v117 = vsel %vm116, %v115, 0.0
    %118 = vadd.xlane.f32.xlu0 %v117
    %v119 = vpop.xlane.xlu0 %118
    %s120 = sld [smem:[#allocation2]]
    %v121 = vstv %s120
    %v122 = vmul.f32 %v121, %v119
    %v123 = vadd.f32 %v122, 0.0
    %vm124 = vcmp.lt.s32.totalorder %v72, %v70
    %v125 = vsel %vm124, %v67, 0.0
    %v126 = vmul.f32 %v125, %v76
    %v127 = vsel %vm79, %v126, 0.0
    %128 = vadd.xlane.f32.xlu0 %v127
    %v129 = vpop.xlane.xlu0 %128
    %130 = vxpose.xlu0.b32.start [1/16] %v129, 128
    %131 = vxpose.xlu0.b32.cont [2/16] 0.0, 128
    %132 = vxpose.xlu0.b32.cont [3/16] 0.0, 128
    %133 = vxpose.xlu0.b32.cont [4/16] 0.0, 128
    %134 = vxpose.xlu0.b32.cont [5/16] 0.0, 128
    %135 = vxpose.xlu0.b32.cont [6/16] 0.0, 128
    %136 = vxpose.xlu0.b32.cont [7/16] 0.0, 128
    %137 = vxpose.xlu0.b32.cont [8/16] 0.0, 128
    %138 = vxpose.xlu0.b32.cont [9/16] 0.0, 128
    %139 = vxpose.xlu0.b32.cont [10/16] 0.0, 128
    %140 = vxpose.xlu0.b32.cont [11/16] 0.0, 128
    %141 = vxpose.xlu0.b32.cont [12/16] 0.0, 128
    %142 = vxpose.xlu0.b32.cont [13/16] 0.0, 128
    %143 = vxpose.xlu0.b32.cont [14/16] 0.0, 128
    %144 = vxpose.xlu0.b32.cont [15/16] 0.0, 128
    %145 = vxpose.xlu0.b32.end [16/16] 0.0, 128
    %v146 = vpop.trf.xlu0
    %v147 = vpop.trf.xlu0
    %v148 = vpop.trf.xlu0
    %v149 = vpop.trf.xlu0
    %v150 = vpop.trf.xlu0
    %v151 = vpop.trf.xlu0
    %v152 = vpop.trf.xlu0
    %v153 = vpop.trf.xlu0
    %v154 = vpop.trf.xlu0
    %v155 = vpop.trf.xlu0
    %v156 = vpop.trf.xlu0
    %v157 = vpop.trf.xlu0
    %v158 = vpop.trf.xlu0
    %v159 = vpop.trf.xlu0
    %v160 = vpop.trf.xlu0
    %v161 = vpop.trf.xlu0
    %v162 = vmul.f32 %v146, %v99
    %v163 = vsel %vm116, %v162, 0.0
    %164 = vadd.xlane.f32.xlu0 %v163
    %v165 = vpop.xlane.xlu0 %164
    %s166 = sld [smem:[#allocation2 + $0x1]]
    %v167 = vstv %s166
    %v168 = vmul.f32 %v167, %v165
    %v169 = vadd.f32 %v123, %v168
    %v170 = vperm.slane %v99, 0
    %v171 = vmul.f32 %v74, %v170
    %v172 = vsel %vm79, %v171, 0.0
    %173 = vadd.xlane.f32.xlu0 %v172
    %v174 = vpop.xlane.xlu0 %173
    %175 = vxpose.xlu0.b32.start [1/16] %v174, 128
    %176 = vxpose.xlu0.b32.cont [2/16] 0.0, 128
    %177 = vxpose.xlu0.b32.cont [3/16] 0.0, 128
    %178 = vxpose.xlu0.b32.cont [4/16] 0.0, 128
    %179 = vxpose.xlu0.b32.cont [5/16] 0.0, 128
    %180 = vxpose.xlu0.b32.cont [6/16] 0.0, 128
    %181 = vxpose.xlu0.b32.cont [7/16] 0.0, 128
    %182 = vxpose.xlu0.b32.cont [8/16] 0.0, 128
    %183 = vxpose.xlu0.b32.cont [9/16] 0.0, 128
    %184 = vxpose.xlu0.b32.cont [10/16] 0.0, 128
    %185 = vxpose.xlu0.b32.cont [11/16] 0.0, 128
    %186 = vxpose.xlu0.b32.cont [12/16] 0.0, 128
    %187 = vxpose.xlu0.b32.cont [13/16] 0.0, 128
    %188 = vxpose.xlu0.b32.cont [14/16] 0.0, 128
    %189 = vxpose.xlu0.b32.cont [15/16] 0.0, 128
    %190 = vxpose.xlu0.b32.end [16/16] 0.0, 128
    %v191 = vpop.trf.xlu0
    %v192 = vpop.trf.xlu0
    %v193 = vpop.trf.xlu0
    %v194 = vpop.trf.xlu0
    %v195 = vpop.trf.xlu0
    %v196 = vpop.trf.xlu0
    %v197 = vpop.trf.xlu0
    %v198 = vpop.trf.xlu0
    %v199 = vpop.trf.xlu0
    %v200 = vpop.trf.xlu0
    %v201 = vpop.trf.xlu0
    %v202 = vpop.trf.xlu0
    %v203 = vpop.trf.xlu0
    %v204 = vpop.trf.xlu0
    %v205 = vpop.trf.xlu0
    %v206 = vpop.trf.xlu0
    %v207 = vmul.f32 %v146, %v191
    %v208 = vsel %vm116, %v207, 0.0
    %209 = vadd.xlane.f32.xlu0 %v208
    %v210 = vpop.xlane.xlu0 %209
    %s211 = sld [smem:[#allocation2 + $0x2]]
    %v212 = vstv %s211
    %v213 = vmul.f32 %v212, %v210
    %v214 = vadd.f32 %v169, %v213
    %v215 = vperm.slane %v146, 0
    %v216 = vmul.f32 %v125, %v215
    %v217 = vsel %vm79, %v216, 0.0
    %218 = vadd.xlane.f32.xlu0 %v217
    %v219 = vpop.xlane.xlu0 %218
    %220 = vxpose.xlu0.b32.start [1/16] %v219, 128
    %221 = vxpose.xlu0.b32.cont [2/16] 0.0, 128
    %222 = vxpose.xlu0.b32.cont [3/16] 0.0, 128
    %223 = vxpose.xlu0.b32.cont [4/16] 0.0, 128
    %224 = vxpose.xlu0.b32.cont [5/16] 0.0, 128
    %225 = vxpose.xlu0.b32.cont [6/16] 0.0, 128
    %226 = vxpose.xlu0.b32.cont [7/16] 0.0, 128
    %227 = vxpose.xlu0.b32.cont [8/16] 0.0, 128
    %228 = vxpose.xlu0.b32.cont [9/16] 0.0, 128
    %229 = vxpose.xlu0.b32.cont [10/16] 0.0, 128
    %230 = vxpose.xlu0.b32.cont [11/16] 0.0, 128
    %231 = vxpose.xlu0.b32.cont [12/16] 0.0, 128
    %232 = vxpose.xlu0.b32.cont [13/16] 0.0, 128
    %233 = vxpose.xlu0.b32.cont [14/16] 0.0, 128
    %234 = vxpose.xlu0.b32.cont [15/16] 0.0, 128
    %235 = vxpose.xlu0.b32.end [16/16] 0.0, 128
    %v236 = vpop.trf.xlu0
    %v237 = vpop.trf.xlu0
    %v238 = vpop.trf.xlu0
    %v239 = vpop.trf.xlu0
    %v240 = vpop.trf.xlu0
    %v241 = vpop.trf.xlu0
    %v242 = vpop.trf.xlu0
    %v243 = vpop.trf.xlu0
    %v244 = vpop.trf.xlu0
    %v245 = vpop.trf.xlu0
    %v246 = vpop.trf.xlu0
    %v247 = vpop.trf.xlu0
    %v248 = vpop.trf.xlu0
    %v249 = vpop.trf.xlu0
    %v250 = vpop.trf.xlu0
    %v251 = vpop.trf.xlu0
    %v252 = vmul.f32 %v236, %v191
    %v253 = vsel %vm116, %v252, 0.0
    %254 = vadd.xlane.f32.xlu0 %v253
    %v255 = vpop.xlane.xlu0 %254
    %s256 = sld [smem:[#allocation2 + $0x3]]
    %v257 = vstv %s256
    %v258 = vmul.f32 %v257, %v255
    %v259 = vadd.f32 %v214, %v258
    %v260 = vsub.f32 1.0, %v259
    %vm261 = vcmask 0
    %262 = vst.msk [vmem:[#allocation5] sm:$0x1] %vm261, %v260
    // Predicated region
    $region26: #{tpu_custom_call.1} parent=1 // pred_check
      _
    $region27: #{tpu_custom_call.1} parent=1 // pred_check_branch
      %264 = sbr.rel (0) target = $region29
    $region28: #{tpu_custom_call.1} parent=1 // pred_region
      %266 = vsyncadd [#allocation3], 0
      %s268 = sshll.u32 [#allocation5], 4
      %s269 = int_to_ptr.vmem [resolvable:$true] %s268
      %s270 = sshll.u32 %s5, 4
      %s271 = int_to_ptr.hbm [resolvable:$true] %s270
      %273 = dma.vmem_to_hbm [thread:$0]  %s269, 16, %s271, [#allocation3]
    $region29: #{tpu_custom_call.1} parent=1 // pred_fallthru
      _
    // Predicated region
    $region30: #{tpu_custom_call.1} parent=1 // pred_check
      _
    $region31: #{tpu_custom_call.1} parent=1 // pred_check_branch
      %275 = sbr.rel (0) target = $region33
    $region32: #{tpu_custom_call.1} parent=1 // pred_region
      %277 = dma.done [#allocation3], 16
    $region33: #{tpu_custom_call.1} parent=1 // pred_fallthru
      _
    %278 = vsyncpa [#allocation3], 1
    %279 = vsyncpa [#allocation4], 1

// kernel: tpu_custom_call.1
$region0: #{tpu_custom_call.1}
  #allocation0 [shape = 'u32[]', space=smem, size = 0x4, offset = 0x4, fixed_abs, tag = 'smem constant byte address 0x4 - core index']
  #allocation1 [shape = 'u32[72,128]{1,0:T(1,128)}', space=vmem, size = 0x9000, scoped, tag = 'internal scratch']
  %s0 = inlined_call_operand.vmem [shape: f32[4], index: 0, kind: input, shape index: {}]
  %s1 = inlined_call_operand.vmem [shape: f32[1,8,32], index: 1, kind: input, shape index: {}]
  %s2 = inlined_call_operand.vmem [shape: f32[1,32,8], index: 2, kind: input, shape index: {}]
  %s3 = inlined_call_operand.vmem [shape: f32[1,32], index: 3, kind: input, shape index: {}]
  %s4 = inlined_call_operand.vmem [shape: f32[1,1,8], index: 4, kind: input, shape index: {}]
  %s5 = inlined_call_operand.hbm [shape: f32[1,1,1], index: 5, kind: output, shape index: {}]
  %s6 = sld [smem:[#allocation0]]
  $region34: #{tpu_custom_call.1} parent=0
    _
  %s8 = ssub.s32 1, %s6
  %s9 = scalar_select 0, %s8, %s6
  $region1: #{tpu_custom_call.1} parent=0
    #allocation2 [shape = 'u8[512]{0}', space=smem, size = 0x200, scoped, tag = 'input window, operand 0, single buffered']
    #allocation3 [shape = 's32[1]{0}', space=sflag, size = 0x4, scoped, tag = 'scoped memory for tpu_custom_call.1']
    #allocation4 [shape = 's32[1]{0}', space=sflag, size = 0x4, scoped, tag = 'scoped memory for tpu_custom_call.1']
    #allocation5 [shape = 'u8[512]{0}', space=vmem, size = 0x400, scoped, tag = 'output window, operand 0, single buffered']
    %10 = vsyncpa [#allocation4], 0
    %11 = vsyncpa [#allocation3], 0
    // Predicated region
    $region2: #{tpu_custom_call.1} parent=1 // pred_check
      _
    $region3: #{tpu_custom_call.1} parent=1 // pred_check_branch
      %13 = sbr.rel (0) target = $region5
    $region4: #{tpu_custom_call.1} parent=1 // pred_region
      %15 = vsyncadd [#allocation4], 0
      %s17 = sshll.u32 %s0, 4
      %s18 = int_to_ptr.vmem [resolvable:$true] %s17
      %20 = dma.vmem_to_smem %s18, 16, [#allocation2], [#allocation4]
    $region5: #{tpu_custom_call.1} parent=1 // pred_fallthru
      _
    // Predicated region
    $region6: #{tpu_custom_call.1} parent=1 // pred_check
      _
    $region7: #{tpu_custom_call.1} parent=1 // pred_check_branch
      %22 = sbr.rel (0) target = $region9
    $region8: #{tpu_custom_call.1} parent=1 // pred_region
      _
    $region9: #{tpu_custom_call.1} parent=1 // pred_fallthru
      _
    // Predicated region
    $region10: #{tpu_custom_call.1} parent=1 // pred_check
      _
    $region11: #{tpu_custom_call.1} parent=1 // pred_check_branch
      %24 = sbr.rel (0) target = $region13
    $region12: #{tpu_custom_call.1} parent=1 // pred_region
      _
    $region13: #{tpu_custom_call.1} parent=1 // pred_fallthru
      _
    // Predicated region
    $region14: #{tpu_custom_call.1} parent=1 // pred_check
      _
    $region15: #{tpu_custom_call.1} parent=1 // pred_check_branch
      %26 = sbr.rel (0) target = $region17
    $region16: #{tpu_custom_call.1} parent=1 // pred_region
      _
    $region17: #{tpu_custom_call.1} parent=1 // pred_fallthru
      _
    // Predicated region
    $region18: #{tpu_custom_call.1} parent=1 // pred_check
      _
    $region19: #{tpu_custom_call.1} parent=1 // pred_check_branch
      %28 = sbr.rel (0) target = $region21
    $region20: #{tpu_custom_call.1} parent=1 // pred_region
      _
    $region21: #{tpu_custom_call.1} parent=1 // pred_fallthru
      _
    // Predicated region
    $region22: #{tpu_custom_call.1} parent=1 // pred_check
      _
    $region23: #{tpu_custom_call.1} parent=1 // pred_check_branch
      %30 = sbr.rel (0) target = $region25
    $region24: #{tpu_custom_call.1} parent=1 // pred_region
      %32 = dma.done [#allocation4], 16
    $region25: #{tpu_custom_call.1} parent=1 // pred_fallthru
      _
    %33 = sfence
    %v34 = vld [vmem:[%s1] sm:$0xff]
    %v35 = vld [vmem:[%s2] sm:$0xff]
    %v36 = vld [vmem:[%s2 + $0x8] sm:$0xff]
    %v37 = vld [vmem:[%s2 + $0x10] sm:$0xff]
    %v38 = vld [vmem:[%s2 + $0x18] sm:$0xff]
    %v39 = vld [vmem:[%s3] sm:$0x1]
    %v40 = vld [vmem:[%s4] sm:$0x1]
    %v42 = vperm.slane %v39, 0
    %v44 = vmul.f32 %v34, %v42
    %vm45 = vcmask 261120
    %v47 = vsel %vm45, %v44, 0
    %49 = vmatpush.msra.mxu0 0.0
    %50 = vmatpush.msra.mxu0 0.0
    %51 = vmatpush.msra.mxu0 0.0
    %52 = vmatpush.msra.mxu0 0.0
    %53 = vmatpush.msra.mxu0 0.0
    %54 = vmatpush.msra.mxu0 0.0
    %55 = vmatpush.msra.mxu0 0.0
    %56 = vmatpush.msra.mxu0 0.0
    %57 = vmatpush.msra.mxu0 0.0
    %58 = vmatpush.msra.mxu0 0.0
    %59 = vmatpush.msra.mxu0 0.0
    %60 = vmatpush.msra.mxu0 0.0
    %61 = vmatpush.msra.mxu0 %v38
    %62 = vmatpush.msra.mxu0 %v37
    %63 = vmatpush.msra.mxu0 %v36
    %64 = vmatpush.msra.mxu0 %v35
    %65 = vmatmul.f32.gmra.mxu0 %v47
    %v66 = vpop.f32.mrf.mxu0
    %v67 = vadd.f32 0.0, %v66
    %68 = vdwg.mxu0
    %v69 = vlaneseq
    %v70 = vshrl.u32 %v69, 7
    %v71 = vlaneseq
    %v72 = vand.u32 %v71, 127
    %vm73 = vcmp.gt.s32.totalorder %v72, %v70
    %v74 = vsel %vm73, %v67, 0.0
    %v76 = vperm.slane %v40, 0
    %v78 = vmul.f32 %v74, %v76
    %vm79 = vcmask 64512
    %v80 = vsel %vm79, %v78, 0.0
    %81 = vadd.xlane.f32.xlu0 %v80
    %v82 = vpop.xlane.xlu0 %81
    %vm83 = vcmp.eq.s32.totalorder %v70, %v72
    %v84 = vsel %vm83, %v82, 0.0
    %v85 = vsel %vm79, %v84, 0.0
    %v86 = vrot.slane %v85, 4
    %v87 = vadd.f32 %v85, %v86
    %v88 = vrot.slane %v87, 2
    %v89 = vadd.f32 %v87, %v88
    %v90 = vrot.slane %v89, 1
    %v91 = vadd.f32 %v89, %v90
    %v92 = vmul.f32 %v40, %v91
    %vm93 = vcmask 57344
    %v94 = vsel %vm93, %v92, 0.0
    %95 = vadd.xlane.f32.xlu0 %v94
    %v96 = vpop.xlane.xlu0 %95
    %s97 = sld [smem:[#allocation2]]
    %v98 = vstv %s97
    %v99 = vmul.f32 %v98, %v96
    %v100 = vadd.f32 %v99, 0.0
    %vm101 = vcmp.lt.s32.totalorder %v72, %v70
    %v102 = vsel %vm101, %v67, 0.0
    %v103 = vmul.f32 %v102, %v76
    %v104 = vsel %vm79, %v103, 0.0
    %105 = vadd.xlane.f32.xlu0 %v104
    %v106 = vpop.xlane.xlu0 %105
    %v107 = vsel %vm83, %v106, 0.0
    %v108 = vsel %vm79, %v107, 0.0
    %v109 = vrot.slane %v108, 4
    %v110 = vadd.f32 %v108, %v109
    %v111 = vrot.slane %v110, 2
    %v112 = vadd.f32 %v110, %v111
    %v113 = vrot.slane %v112, 1
    %v114 = vadd.f32 %v112, %v113
    %v115 = vmul.f32 %v114, %v91
    %v116 = vsel %vm79, %v115, 0.0
    %117 = vadd.xlane.f32.xlu0 %v116
    %v118 = vpop.xlane.xlu0 %117
    %s119 = sld [smem:[#allocation2 + $0x1]]
    %v120 = vstv %s119
    %v121 = vmul.f32 %v120, %v118
    %v122 = vadd.f32 %v100, %v121
    %v123 = vmul.f32 %v74, %v91
    %v124 = vsel %vm79, %v123, 0.0
    %125 = vadd.xlane.f32.xlu0 %v124
    %v126 = vpop.xlane.xlu0 %125
    %v127 = vsel %vm83, %v126, 0.0
    %v128 = vsel %vm79, %v127, 0.0
    %v129 = vrot.slane %v128, 4
    %v130 = vadd.f32 %v128, %v129
    %v131 = vrot.slane %v130, 2
    %v132 = vadd.f32 %v130, %v131
    %v133 = vrot.slane %v132, 1
    %v134 = vadd.f32 %v132, %v133
    %v135 = vmul.f32 %v114, %v134
    %v136 = vsel %vm79, %v135, 0.0
    %137 = vadd.xlane.f32.xlu0 %v136
    %v138 = vpop.xlane.xlu0 %137
    %s139 = sld [smem:[#allocation2 + $0x2]]
    %v140 = vstv %s139
    %v141 = vmul.f32 %v140, %v138
    %v142 = vadd.f32 %v122, %v141
    %v143 = vmul.f32 %v102, %v114
    %v144 = vsel %vm79, %v143, 0.0
    %145 = vadd.xlane.f32.xlu0 %v144
    %v146 = vpop.xlane.xlu0 %145
    %v147 = vsel %vm83, %v146, 0.0
    %v148 = vsel %vm79, %v147, 0.0
    %v149 = vrot.slane %v148, 4
    %v150 = vadd.f32 %v148, %v149
    %v151 = vrot.slane %v150, 2
    %v152 = vadd.f32 %v150, %v151
    %v153 = vrot.slane %v152, 1
    %v154 = vadd.f32 %v152, %v153
    %v155 = vmul.f32 %v154, %v134
    %v156 = vsel %vm79, %v155, 0.0
    %157 = vadd.xlane.f32.xlu0 %v156
    %v158 = vpop.xlane.xlu0 %157
    %s159 = sld [smem:[#allocation2 + $0x3]]
    %v160 = vstv %s159
    %v161 = vmul.f32 %v160, %v158
    %v162 = vadd.f32 %v142, %v161
    %v163 = vsub.f32 1.0, %v162
    %vm164 = vcmask 0
    %165 = vst.msk [vmem:[#allocation5] sm:$0x1] %vm164, %v163
    // Predicated region
    $region26: #{tpu_custom_call.1} parent=1 // pred_check
      _
    $region27: #{tpu_custom_call.1} parent=1 // pred_check_branch
      %167 = sbr.rel (0) target = $region29
    $region28: #{tpu_custom_call.1} parent=1 // pred_region
      %169 = vsyncadd [#allocation3], 0
      %s171 = sshll.u32 [#allocation5], 4
      %s172 = int_to_ptr.vmem [resolvable:$true] %s171
      %s173 = sshll.u32 %s5, 4
      %s174 = int_to_ptr.hbm [resolvable:$true] %s173
      %176 = dma.vmem_to_hbm [thread:$0]  %s172, 16, %s174, [#allocation3]
    $region29: #{tpu_custom_call.1} parent=1 // pred_fallthru
      _
    // Predicated region
    $region30: #{tpu_custom_call.1} parent=1 // pred_check
      _
    $region31: #{tpu_custom_call.1} parent=1 // pred_check_branch
      %178 = sbr.rel (0) target = $region33
    $region32: #{tpu_custom_call.1} parent=1 // pred_region
      %180 = dma.done [#allocation3], 16
    $region33: #{tpu_custom_call.1} parent=1 // pred_fallthru
      _
    %181 = vsyncpa [#allocation3], 1
    %182 = vsyncpa [#allocation4], 1

</llo_original>
